<compile_context>
chip_gen: v7x
topology: tpu7x:2x2x1
jax: 0.10.0
libtpu: 0.0.40
codegen_flags: <defaults>
</compile_context>

<pallas_src>
import jax
import jax.numpy as jnp
from jax.experimental import pallas as pl
from jax.experimental.pallas import tpu as pltpu

_LANE = 128
_MEGACORE_MIN_BYTES = 1 << 20  # only bother balancing the grid above ~1 MiB


def _relu_kernel(x_ref, o_ref):
    # Pure VPU elementwise max with a same-dtype zero on the whole VMEM tile.
    o_ref[...] = jnp.maximum(x_ref[...], jnp.zeros((), x_ref.dtype))


def _tile_budget():
    """(target block bytes, vmem_limit_bytes) chosen from the chip's VMEM size."""
    try:
        vmem_cap = int(pltpu.get_tpu_info().vmem_capacity_bytes)
    except Exception:
        vmem_cap = 64 << 20  # conservative default: assume the smallest (v7x-like) VMEM
    if vmem_cap >= (96 << 20):
        # v5e / v6e: 128 MiB VMEM per TensorCore -> bigger blocks, fewer steps.
        return 12 << 20, 64 << 20
    # v7x: 64 MiB VMEM per TensorCore -> keep 2 arrays x double-buffer <= ~32 MiB.
    return 8 << 20, 40 << 20


def _pick_width(n_main):
    # Lane-dense slab width: largest candidate multiple of 128 dividing n_main.
    for cand in (4096, 2048, 1024, 512, 256, _LANE):
        if n_main % cand == 0:
            return cand
    return _LANE


def _pick_row_tile(rows, width, itemsize, sub_min, target_block_bytes):
    """Row-tile: ~target-sized blocks, multiple of sub_min, preferring an even
    grid length (>= 2) on big slabs so v7x's two TensorCores split evenly."""
    if rows <= sub_min:
        return rows  # single block; row dim equals the full array dim (allowed)

    t_target = max(1, (target_block_bytes // (width * itemsize)) // sub_min)
    r_units = -(-rows // sub_min)          # rows in sub_min units (ceil)
    t_best = min(t_target, r_units)

    t = t_best
    if rows * width * itemsize >= _MEGACORE_MIN_BYTES:
        # Search for an even block count, shrinking the block by at most ~2x.
        for cand in range(t_best, max(1, t_best // 2) - 1, -1):
            if (-(-r_units // cand)) % 2 == 0:
                t = cand
                break
    tr = t * sub_min
    if tr >= rows:
        tr = rows
    return tr


def relu_pallas(x, *, donate_input=False):
    """Elementwise ReLU via a tiled, lane-dense Pallas TPU kernel.

    Works for arbitrary input rank/shape: layout is irrelevant for an
    elementwise op, so the data is viewed as a (rows, width) slab with width a
    multiple of 128 (all stores full-width, no masked vst).
    """
    orig_shape = x.shape
    dtype = x.dtype
    n = x.size
    if n == 0:
        return x

    flat = x.reshape(-1)
    itemsize = jnp.dtype(dtype).itemsize
    # Sub-32-bit dtypes pack along sublanes: dtype-correct sublane minimum.
    sub_min = {4: 8, 2: 16, 1: 32}.get(itemsize, 8)

    # Lane-aligned prefix goes through Pallas; a <128-element ragged tail (rare,
    # never hit for typical NCHW activation sizes or the demo shape) is handled
    # by one tiny jnp.maximum instead of padding + slicing the whole tensor.
    n_main = (n // _LANE) * _LANE
    if n_main == 0:
        # Degenerate tiny tensor (< 128 elements): not worth an HBM round-trip.
        return jnp.maximum(flat, jnp.zeros((), dtype)).reshape(orig_shape)

    ragged = n_main != n
    main = flat[:n_main] if ragged else flat

    width = _pick_width(n_main)
    rows = n_main // width
    target_block_bytes, vmem_limit = _tile_budget()
    tr = _pick_row_tile(rows, width, itemsize, sub_min, target_block_bytes)
    grid = (pl.cdiv(rows, tr),)

    x2 = main.reshape(rows, width)

    call_kwargs = {}
    if donate_input and not ragged:
        # In-place-style ReLU: reuse the (contiguously reshaped) input HBM
        # buffer for the output. Skipped on the ragged path, where the kernel
        # input is a sliced copy rather than the caller's buffer.
        call_kwargs["input_output_aliases"] = {0: 0}

    out = pl.pallas_call(
        _relu_kernel,
        out_shape=jax.ShapeDtypeStruct((rows, width), dtype),
        grid_spec=pltpu.PrefetchScalarGridSpec(
            num_scalar_prefetch=0,
            grid=grid,
            in_specs=[pl.BlockSpec((tr, width), lambda i: (i, 0))],
            out_specs=pl.BlockSpec((tr, width), lambda i: (i, 0)),
        ),
        compiler_params=pltpu.CompilerParams(
            dimension_semantics=("parallel",),   # megacore split on v7x
            vmem_limit_bytes=vmem_limit,         # generation-aware headroom
        ),
        cost_estimate=pl.CostEstimate(
            flops=n_main,
            transcendentals=0,
            bytes_accessed=2 * n_main * itemsize,
        ),
        **call_kwargs,
    )(x2)

    out_flat = out.reshape(-1)
    if ragged:
        tail = jnp.maximum(flat[n_main:], jnp.zeros((), dtype))
        out_flat = jnp.concatenate([out_flat, tail])
    return out_flat.reshape(orig_shape)


if __name__ == "__main__":
    key = jax.random.PRNGKey(0)
    # Small NCHW-shaped input consistent with the module: (2, 4, 16, 16)
    x = jax.random.normal(key, (2, 4, 16, 16), dtype=jnp.float32)

    y = relu_pallas(x)
    jax.block_until_ready(y)

    # Correctness check against plain JAX reference.
    y_ref = jnp.maximum(x, 0.0)
    assert y.shape == x.shape and y.dtype == x.dtype
    assert bool(jnp.allclose(y, y_ref)), "mismatch vs reference relu"

    print("KERNEL_OK")
</pallas_src>

<mosaic_0001>
module attributes {stable_mosaic.version = 11 : i64} {
  func.func @_relu_kernel(%arg0: i32, %arg1: memref<1x2048xf32, #tpu.memory_space<vmem>>, %arg2: memref<1x2048xf32, #tpu.memory_space<vmem>>) attributes {dimension_semantics = [#tpu.dimension_semantics<parallel>], iteration_bounds = array<i64: 1>, scalar_prefetch = 0 : i64, scratch_operands = 0 : i64, tpu.core_type = #tpu.core_type<tc>, window_params = [{transform_indices = @transform_0, window_bounds = array<i64: 1, 2048>}, {transform_indices = @transform_1, window_bounds = array<i64: 1, 2048>}]} {
    %c0 = arith.constant 0 : index
    %c0_0 = arith.constant 0 : index
    %0 = vector.load %arg1[%c0, %c0_0] : memref<1x2048xf32, #tpu.memory_space<vmem>>, vector<1x2048xf32>
    %cst = arith.constant 0.000000e+00 : f32
    %1 = vector.broadcast %cst : f32 to vector<1x2048xf32>
    %2 = arith.maximumf %0, %1 : vector<1x2048xf32>
    %c0_1 = arith.constant 0 : index
    %c0_2 = arith.constant 0 : index
    %3 = vector.load %arg2[%c0_1, %c0_2] : memref<1x2048xf32, #tpu.memory_space<vmem>>, vector<1x2048xf32>
    tpu.vector_store %arg2[%c0_1, %c0_2], %2 {strides = array<i32>} : memref<1x2048xf32, #tpu.memory_space<vmem>>, vector<1x2048xf32>,
    return
  }
  func.func @transform_0(%arg0: i32) -> (i32, i32) {
    %c0_i32 = arith.constant 0 : i32
    %c0_i32_0 = arith.constant 0 : i32
    return %arg0, %c0_i32 : i32, i32
  }
  func.func @transform_1(%arg0: i32) -> (i32, i32) {
    %c0_i32 = arith.constant 0 : i32
    %c0_i32_0 = arith.constant 0 : i32
    return %arg0, %c0_i32 : i32, i32
  }
}

</mosaic_0001>

<llo_original>
// kernel: tpu_custom_call.1
$region0: #{tpu_custom_call.1}
  #allocation0 [shape = 'u32[]', space=smem, size = 0x4, offset = 0x4, fixed_abs, tag = 'smem constant byte address 0x4 - core index']
  #allocation1 [shape = 'u32[144,128]{1,0:T(1,128)}', space=vmem, size = 0x12000, scoped, tag = 'internal scratch']
  %s0 = inlined_call_operand.hbm [shape: f32[1,2048], index: 0, kind: input, shape index: {}]
  %s1 = inlined_call_operand.hbm [shape: f32[1,2048], index: 1, kind: output, shape index: {}]
  %s2 = sld [smem:[#allocation0]]
  $region18: #{tpu_custom_call.1} parent=0
    _
  %s4 = ssub.s32 1, %s2
  %s5 = scalar_select 0, %s4, %s2
  $region1: #{tpu_custom_call.1} parent=0
    #allocation2 [shape = 'u8[8192]{0}', space=vmem, size = 0x2000, scoped, tag = 'input window, operand 0, single buffered']
    #allocation3 [shape = 's32[1]{0}', space=sflag, size = 0x4, scoped, tag = 'scoped memory for tpu_custom_call.1']
    #allocation4 [shape = 's32[1]{0}', space=sflag, size = 0x4, scoped, tag = 'scoped memory for tpu_custom_call.1']
    #allocation5 [shape = 'u8[8192]{0}', space=vmem, size = 0x2000, scoped, tag = 'output window, operand 0, single buffered']
    %6 = vsyncpa [#allocation3], 0
    %7 = vsyncpa [#allocation4], 0
    // Predicated region
    $region2: #{tpu_custom_call.1} parent=1 // pred_check
      _
    $region3: #{tpu_custom_call.1} parent=1 // pred_check_branch
      %9 = sbr.rel (0) target = $region5
    $region4: #{tpu_custom_call.1} parent=1 // pred_region
      %s11 = ssub.s32 256, 256
      %12 = vsyncadd [#allocation3], %s11
      %s14 = sshll.u32 [#allocation2], 4
      %s15 = int_to_ptr.vmem [resolvable:$true] %s14
      %17 = dma.hbm_to_vmem [thread:$0]  %s0, 256, %s15, [#allocation3]
    $region5: #{tpu_custom_call.1} parent=1 // pred_fallthru
      _
    // Predicated region
    $region6: #{tpu_custom_call.1} parent=1 // pred_check
      _
    $region7: #{tpu_custom_call.1} parent=1 // pred_check_branch
      %19 = sbr.rel (0) target = $region9
    $region8: #{tpu_custom_call.1} parent=1 // pred_region
      %20 = dma.done [#allocation3], 256
    $region9: #{tpu_custom_call.1} parent=1 // pred_fallthru
      _
    %v21 = vld [vmem:[#allocation2] sm:$0xff]
    %v22 = vld [vmem:[#allocation2 + $0x8] sm:$0xff]
    %v23 = vmax.f32 %v21, 0.0
    %v24 = vmax.f32 %v22, 0.0
    %25 = vst [vmem:[#allocation5] sm:$0xff] %v23
    %26 = vst [vmem:[#allocation5 + $0x8] sm:$0xff] %v24
    // Predicated region
    $region10: #{tpu_custom_call.1} parent=1 // pred_check
      _
    $region11: #{tpu_custom_call.1} parent=1 // pred_check_branch
      %28 = sbr.rel (0) target = $region13
    $region12: #{tpu_custom_call.1} parent=1 // pred_region
      %s30 = ssub.s32 256, 256
      %31 = vsyncadd [#allocation4], %s30
      %s33 = sshll.u32 [#allocation5], 4
      %s34 = int_to_ptr.vmem [resolvable:$true] %s33
      %36 = dma.vmem_to_hbm [thread:$0]  %s34, 256, %s1, [#allocation4]
    $region13: #{tpu_custom_call.1} parent=1 // pred_fallthru
      _
    // Predicated region
    $region14: #{tpu_custom_call.1} parent=1 // pred_check
      _
    $region15: #{tpu_custom_call.1} parent=1 // pred_check_branch
      %38 = sbr.rel (0) target = $region17
    $region16: #{tpu_custom_call.1} parent=1 // pred_region
      %39 = dma.done [#allocation4], 256
    $region17: #{tpu_custom_call.1} parent=1 // pred_fallthru
      _
    %40 = vsyncpa [#allocation3], 1
    %41 = vsyncpa [#allocation4], 1

</llo_original>
